<compile_context>
chip_gen: v7x
topology: tpu7x:2x2x1
jax: 0.10.0
libtpu: 0.0.40
codegen_flags: <defaults>
</compile_context>

<pallas_src>
import functools
import math

import jax
import jax.numpy as jnp
from jax.experimental import pallas as pl
from jax.experimental.pallas import tpu as pltpu


def _round_up(x, m):
    return ((x + m - 1) // m) * m


def _ln_bias_store(y, b_ref, g_ref, bt_ref, o_ref):
    """bias add + per-C-group LayerNorm + store, on the lane-dense 2-D tile."""
    c = g_ref.shape[-1]
    groups = y.shape[-1] // c
    y = y + b_ref[...].astype(jnp.float32)
    gamma = g_ref[...].astype(jnp.float32)      # (1, C)
    beta = bt_ref[...].astype(jnp.float32)      # (1, C)
    for i in range(groups):                     # static, small (= n_tile // C)
        seg = y[:, i * c:(i + 1) * c]
        mean = jnp.mean(seg, axis=-1, keepdims=True)
        var = jnp.mean(jnp.square(seg - mean), axis=-1, keepdims=True)
        seg = (seg - mean) * jax.lax.rsqrt(var + 1e-5)
        o_ref[:, i * c:(i + 1) * c] = (seg * gamma + beta).astype(o_ref.dtype)


@functools.lru_cache(maxsize=None)
def _make_kernel(folded):
    if folded:
        # Single fused matmul: visual_projection folded into the adapter linear.
        def kernel(t2a_ref, x_ref, w_ref, b_ref, g_ref, bt_ref, o_ref):
            del t2a_ref
            y = jnp.dot(x_ref[...], w_ref[...], preferred_element_type=jnp.float32)
            _ln_bias_store(y, b_ref, g_ref, bt_ref, o_ref)
    else:
        # Two chained matmuls; the narrow (block_m, I) intermediate stays on-chip.
        def kernel(t2a_ref, x_ref, wvp_ref, w_ref, b_ref, g_ref, bt_ref, o_ref):
            del t2a_ref
            h = jnp.dot(x_ref[...], wvp_ref[...], preferred_element_type=jnp.float32)
            y = jnp.dot(h.astype(w_ref.dtype), w_ref[...],
                        preferred_element_type=jnp.float32)
            _ln_bias_store(y, b_ref, g_ref, bt_ref, o_ref)
    return kernel


def _select_tiles(M, E, inter_dim, C, token_counts, folded, compute_dtype,
                  out_dtype, single_adapter):
    """Pick (block_m, cols_per_tile): column tile = whole multiple of C,
    lane-dense (multiple of 128 when possible), per-step double-buffered VMEM
    within a conservative budget (fits v7x 64 MiB / small v5e scoped VMEM)."""
    cb = jnp.dtype(compute_dtype).itemsize
    ob = jnp.dtype(out_dtype).itemsize
    kdim = E if folded else inter_dim
    g = functools.reduce(math.gcd, token_counts)
    max_lanes = 2048
    ks = [k for k in range(1, g + 1)
          if g % k == 0 and (k * C) % 128 == 0 and k * C <= max_lanes]
    if not ks:
        if single_adapter:
            ks = [token_counts[0]]     # full-width tile == full array dim (legal)
        else:
            return None                # caller falls back to per-adapter launches
    if M <= 512:
        bms = [_round_up(M, 8)]
    else:
        # prefer large blocks (HBM roofline), but avoid pathological M padding
        cands = [512, 384, 256, 128]
        bms = sorted(cands, key=lambda bm: (pl.cdiv(M, bm) * bm - M, -bm))
    budget = 40 * 1024 * 1024

    def vmem_est(bm, k):
        nt = k * C
        v = (2 * bm * E * cb          # x tile (double-buffered by the pipeline)
             + 2 * kdim * nt * cb     # weight column tile
             + 2 * nt * 4             # bias tile
             + 2 * bm * nt * ob       # output tile
             + 4 * C * 4)             # gamma / beta
        if not folded:
            v += 2 * E * inter_dim * cb + bm * inter_dim * 4
        return v

    for bm in bms:
        for k in sorted(ks, reverse=True):
            if vmem_est(bm, k) <= budget:
                return bm, k
    return bms[-1], min(ks)


@functools.partial(
    jax.jit,
    static_argnames=("folded", "token_counts", "cross_dim", "cols_per_tile",
                     "block_m", "compute_dtype", "out_dtype"))
def _multi_ip_forward(embeds, t2a, wvp, w_cat, b_cat, gamma, beta, *,
                      folded, token_counts, cross_dim, cols_per_tile, block_m,
                      compute_dtype, out_dtype):
    """embeds: tuple of (B, N, E) arrays (same shape/dtype).
    t2a: (n_col_tiles,) int32 column-tile -> adapter table (scalar prefetch).
    w_cat: (Kdim, sum T*C) column-concatenated weights, b_cat: (1, sum T*C),
    gamma/beta: (A, 1, C).  Returns a tuple of (B, N, T_a, C) arrays."""
    B, N, E = embeds[0].shape
    C = cross_dim
    kdim, total_tc = w_cat.shape
    n_tile = cols_per_tile * C
    n_col_tiles = total_tc // n_tile
    M = B * N
    m_pad = _round_up(M, block_m)
    m_blocks = m_pad // block_m

    x = jnp.stack([e.reshape(M, E) for e in embeds]).astype(compute_dtype)
    if m_pad != M:
        x = jnp.pad(x, ((0, 0), (0, m_pad - M), (0, 0)))
    w_c = w_cat.astype(compute_dtype)

    args = [t2a, x]
    in_specs = [
        # x: pick the adapter that owns this column tile via the prefetch table.
        pl.BlockSpec((None, block_m, E), lambda j, m, t2a_ref: (t2a_ref[j], m, 0)),
    ]
    if not folded:
        args.append(wvp.astype(compute_dtype))
        in_specs.append(pl.BlockSpec(wvp.shape, lambda j, m, t2a_ref: (0, 0)))
    args += [w_c, b_cat, gamma, beta]
    in_specs += [
        pl.BlockSpec((kdim, n_tile), lambda j, m, t2a_ref: (0, j)),
        pl.BlockSpec((1, n_tile), lambda j, m, t2a_ref: (0, j)),
        pl.BlockSpec((None, 1, C), lambda j, m, t2a_ref: (t2a_ref[j], 0, 0)),
        pl.BlockSpec((None, 1, C), lambda j, m, t2a_ref: (t2a_ref[j], 0, 0)),
    ]
    out_spec = pl.BlockSpec((block_m, n_tile), lambda j, m, t2a_ref: (m, j))

    # Explicit scoped-VMEM limit from the actual per-step footprint.
    cb = jnp.dtype(compute_dtype).itemsize
    ob = jnp.dtype(out_dtype).itemsize
    est = (2 * block_m * E * cb + 2 * kdim * n_tile * cb + 2 * n_tile * 4
           + 2 * block_m * n_tile * ob + 4 * C * 4)
    if not folded:
        est += 2 * E * kdim * cb + block_m * kdim * 4
    vmem_limit = int(min(max(est + (8 << 20), 32 << 20), 64 << 20))

    # Megacore sharding: shard the column axis when weights dominate (small M),
    # shard the m axis when M dominates.
    dims = (("parallel", "arbitrary") if n_col_tiles >= m_blocks
            else ("arbitrary", "parallel"))

    out = pl.pallas_call(
        _make_kernel(folded),
        out_shape=jax.ShapeDtypeStruct((m_pad, total_tc), out_dtype),
        grid_spec=pltpu.PrefetchScalarGridSpec(
            num_scalar_prefetch=1,
            grid=(n_col_tiles, m_blocks),
            in_specs=in_specs,
            out_specs=out_spec,
        ),
        compiler_params=pltpu.CompilerParams(
            dimension_semantics=dims,
            vmem_limit_bytes=vmem_limit),
    )(*args)

    # Strip M padding and split the concatenated columns back per adapter.
    outs = []
    off = 0
    for t in token_counts:
        tc = t * C
        outs.append(out[:M, off:off + tc].reshape(B, N, t, C))
        off += tc
    return tuple(outs)


class MultiIPAdapterImageProjectionWithVisualProjectionPallas:
    """visual_projection (Linear E->I, no bias) + MultiIPAdapterImageProjection.

    adapter_cfgs: list of (num_image_text_embeds, cross_attention_dim).
    """

    def __init__(self, key, embedding_dim, intermediate_embedding_dim,
                 adapter_cfgs, compute_dtype=jnp.bfloat16, out_dtype=None):
        self.E = int(embedding_dim)
        self.I = int(intermediate_embedding_dim)
        self.compute_dtype = compute_dtype
        self.out_dtype = out_dtype
        # Fold visual_projection into the adapter linear only when it does not
        # inflate HBM weight traffic (E <= I); else keep two in-kernel matmuls.
        self.folded = self.E <= self.I

        keys = jax.random.split(key, 1 + 2 * len(adapter_cfgs))
        # Raw parameters in PyTorch layout (kept for the reference check).
        self.w_vp = jax.random.normal(
            keys[0], (self.I, self.E), dtype=jnp.float32) * 0.02
        self.adapters = []
        for i, (num_tokens, cross_dim) in enumerate(adapter_cfgs):
            k_w, k_b = keys[1 + 2 * i], keys[2 + 2 * i]
            w_ip = jax.random.normal(
                k_w, (num_tokens * cross_dim, self.I), dtype=jnp.float32) * 0.02
            b_ip = jax.random.normal(
                k_b, (num_tokens * cross_dim,), dtype=jnp.float32) * 0.01
            gamma = jnp.ones((cross_dim,), dtype=jnp.float32)
            beta = jnp.zeros((cross_dim,), dtype=jnp.float32)
            self.adapters.append((w_ip, b_ip, gamma, beta, num_tokens, cross_dim))
        self._build_packed()

    def _build_packed(self):
        hi = jax.lax.Precision.HIGHEST
        self._wvp_T = self.w_vp.T                              # (E, I)
        per = []
        for (w_ip, b_ip, gamma, beta, T, C) in self.adapters:
            if self.folded:
                w = jnp.dot(self._wvp_T, w_ip.T, precision=hi)  # (E, T*C)
            else:
                w = w_ip.T                                       # (I, T*C)
            per.append((w, b_ip[None, :], gamma[None, None, :],
                        beta[None, None, :], T, C))
        self._per_adapter = per

        cross_dims = {a[5] for a in self.adapters}
        self._uniform_c = len(cross_dims) == 1
        if not self._uniform_c:
            return
        self._C = next(iter(cross_dims))
        self._token_counts = tuple(a[4] for a in self.adapters)
        # No padding to max T*C: concatenate adapters column-wise.
        self._w_cat = jnp.concatenate([p[0] for p in per], axis=1)    # (Kdim, sum TC)
        self._b_cat = jnp.concatenate([p[1] for p in per], axis=1)    # (1, sum TC)
        self._gamma_st = jnp.concatenate([p[2] for p in per], axis=0)  # (A, 1, C)
        self._beta_st = jnp.concatenate([p[3] for p in per], axis=0)   # (A, 1, C)

    def __call__(self, image_embeds):
        out_dt_default = (self.out_dtype if self.out_dtype is not None
                          else image_embeds[0].dtype)
        same_shape = len({tuple(e.shape) for e in image_embeds}) == 1
        same_dtype = len({jnp.dtype(e.dtype) for e in image_embeds}) == 1
        if (self._uniform_c and same_shape and same_dtype
                and len(image_embeds) == len(self._per_adapter)):
            B, N, _ = image_embeds[0].shape
            sel = _select_tiles(B * N, self.E, self.I, self._C,
                                self._token_counts, self.folded,
                                self.compute_dtype, out_dt_default,
                                single_adapter=(len(self._per_adapter) == 1))
            if sel is not None:
                block_m, k = sel
                t2a = []
                for a, t in enumerate(self._token_counts):
                    t2a += [a] * (t // k)
                t2a = jnp.asarray(t2a, dtype=jnp.int32)
                outs = _multi_ip_forward(
                    tuple(image_embeds), t2a,
                    None if self.folded else self._wvp_T,
                    self._w_cat, self._b_cat, self._gamma_st, self._beta_st,
                    folded=self.folded, token_counts=self._token_counts,
                    cross_dim=self._C, cols_per_tile=k, block_m=block_m,
                    compute_dtype=self.compute_dtype, out_dtype=out_dt_default)
                return list(outs)
        # Fallback: mixed cross_attention_dims / mismatched embed shapes ->
        # one launch per adapter through the same kernel (A == 1).
        outs = []
        for embed, (w, b, gamma, beta, T, C) in zip(image_embeds, self._per_adapter):
            B, N, _ = embed.shape
            out_dt = self.out_dtype if self.out_dtype is not None else embed.dtype
            block_m, k = _select_tiles(B * N, self.E, self.I, C, (T,),
                                       self.folded, self.compute_dtype, out_dt,
                                       single_adapter=True)
            t2a = jnp.zeros((T // k,), dtype=jnp.int32)
            (o,) = _multi_ip_forward(
                (embed,), t2a, None if self.folded else self._wvp_T,
                w, b, gamma, beta,
                folded=self.folded, token_counts=(T,), cross_dim=C,
                cols_per_tile=k, block_m=block_m,
                compute_dtype=self.compute_dtype, out_dtype=out_dt)
            outs.append(o)
        return outs


def _reference(image_embeds, module):
    """Plain-JAX reference mirroring the PyTorch forward pass exactly (f32)."""
    hi = jax.lax.Precision.HIGHEST
    outs = []
    for embed, (w_ip, b_ip, gamma, beta, T, C) in zip(image_embeds, module.adapters):
        B, N, _ = embed.shape
        h = jnp.matmul(embed.astype(jnp.float32), module.w_vp.T, precision=hi)
        h = h.reshape(B * N, -1)
        y = jnp.matmul(h, w_ip.T, precision=hi) + b_ip
        y = y.reshape(B * N, -1, C)
        mean = y.mean(-1, keepdims=True)
        var = ((y - mean) ** 2).mean(-1, keepdims=True)
        y = (y - mean) / jnp.sqrt(var + 1e-5) * gamma + beta
        outs.append(y.reshape(B, N, T, C))
    return outs


if __name__ == "__main__":
    key = jax.random.PRNGKey(0)
    (k_pa, k_pb, k_pc, k_a0, k_a1, k_b0, k_b1, k_c0, k_c1) = jax.random.split(key, 9)

    B, N = 2, 4                               # batch, num_images  -> M = 8

    # --- Config A: E <= I -> folded single-matmul path, fused multi-adapter call.
    modA = MultiIPAdapterImageProjectionWithVisualProjectionPallas(
        k_pa, 32, 64, [(4, 128), (8, 128)], compute_dtype=jnp.bfloat16)
    embeds_a = [jax.random.normal(k_a0, (B, N, 32), dtype=jnp.float32),
                jax.random.normal(k_a1, (B, N, 32), dtype=jnp.float32)]
    refs_a = _reference(embeds_a, modA)

    outs = [jax.block_until_ready(o) for o in modA(embeds_a)]           # bf16 MXU
    for o, r in zip(outs, refs_a):
        assert o.shape == r.shape, (o.shape, r.shape)
        err = float(jnp.max(jnp.abs(o.astype(jnp.float32) - r)))
        assert err < 0.25, err

    modA.compute_dtype = jnp.float32                                    # f32 path
    outs = [jax.block_until_ready(o) for o in modA(embeds_a)]
    for o, r in zip(outs, refs_a):
        assert o.shape == r.shape, (o.shape, r.shape)
        assert jnp.allclose(o, r, atol=5e-2, rtol=5e-2), float(
            jnp.max(jnp.abs(o - r)))

    # --- Config B: E > I -> unfolded two-matmul path, still one fused call.
    modB = MultiIPAdapterImageProjectionWithVisualProjectionPallas(
        k_pb, 64, 32, [(4, 128), (8, 128)], compute_dtype=jnp.float32)
    embeds_b = [jax.random.normal(k_b0, (B, N, 64), dtype=jnp.float32),
                jax.random.normal(k_b1, (B, N, 64), dtype=jnp.float32)]
    refs_b = _reference(embeds_b, modB)
    outs = [jax.block_until_ready(o) for o in modB(embeds_b)]
    for o, r in zip(outs, refs_b):
        assert o.shape == r.shape, (o.shape, r.shape)
        assert jnp.allclose(o, r, atol=5e-2, rtol=5e-2), float(
            jnp.max(jnp.abs(o - r)))

    # --- Config C: mixed cross_attention_dims -> per-adapter fallback path.
    modC = MultiIPAdapterImageProjectionWithVisualProjectionPallas(
        k_pc, 32, 64, [(4, 128), (2, 256)], compute_dtype=jnp.float32)
    embeds_c = [jax.random.normal(k_c0, (B, N, 32), dtype=jnp.float32),
                jax.random.normal(k_c1, (B, N, 32), dtype=jnp.float32)]
    refs_c = _reference(embeds_c, modC)
    outs = [jax.block_until_ready(o) for o in modC(embeds_c)]
    for o, r in zip(outs, refs_c):
        assert o.shape == r.shape, (o.shape, r.shape)
        assert jnp.allclose(o, r, atol=5e-2, rtol=5e-2), float(
            jnp.max(jnp.abs(o - r)))

    print("KERNEL_OK")
</pallas_src>

<mosaic_0001>
module attributes {stable_mosaic.version = 11 : i64} {
  func.func @kernel(%arg0: i32, %arg1: i32, %arg2: memref<3xi32, #tpu.memory_space<smem>>, %arg3: memref<1x8x32xbf16, #tpu.memory_space<vmem>>, %arg4: memref<32x512xbf16, #tpu.memory_space<vmem>>, %arg5: memref<1x512xf32, #tpu.memory_space<vmem>>, %arg6: memref<1x1x128xf32, #tpu.memory_space<vmem>>, %arg7: memref<1x1x128xf32, #tpu.memory_space<vmem>>, %arg8: memref<8x512xf32, #tpu.memory_space<vmem>>) attributes {dimension_semantics = [#tpu.dimension_semantics<parallel>, #tpu.dimension_semantics<arbitrary>], iteration_bounds = array<i64: 3, 1>, scalar_prefetch = 1 : i64, scratch_operands = 0 : i64, tpu.core_type = #tpu.core_type<tc>, window_params = [{transform_indices = @transform_0, window_bounds = array<i64: 1, 8, 32>}, {transform_indices = @transform_1, window_bounds = array<i64: 32, 512>}, {transform_indices = @transform_2, window_bounds = array<i64: 1, 512>}, {transform_indices = @transform_3, window_bounds = array<i64: 1, 1, 128>}, {transform_indices = @transform_4, window_bounds = array<i64: 1, 1, 128>}, {transform_indices = @transform_5, window_bounds = array<i64: 8, 512>}]} {
    %c0 = arith.constant 0 : index
    %c0_0 = arith.constant 0 : index
    %c0_1 = arith.constant 0 : index
    %0 = vector.load %arg3[%c0, %c0_0, %c0_1] : memref<1x8x32xbf16, #tpu.memory_space<vmem>>, vector<1x8x32xbf16>
    %1 = vector.shape_cast %0 : vector<1x8x32xbf16> to vector<8x32xbf16>
    %c0_2 = arith.constant 0 : index
    %c0_3 = arith.constant 0 : index
    %2 = vector.load %arg4[%c0_2, %c0_3] : memref<32x512xbf16, #tpu.memory_space<vmem>>, vector<32x512xbf16>
    %cst = arith.constant dense<0.000000e+00> : vector<8x512xf32>
    %3 = tpu.matmul %1, %2, %cst {dimension_numbers = #tpu.dot_dimension_numbers<[1], [0], [0], [1], [0, 0, 1, 1], [], []>} : vector<8x32xbf16>, vector<32x512xbf16>, vector<8x512xf32> -> vector<8x512xf32>
    %c0_4 = arith.constant 0 : index
    %c0_5 = arith.constant 0 : index
    %4 = vector.load %arg5[%c0_4, %c0_5] : memref<1x512xf32, #tpu.memory_space<vmem>>, vector<1x512xf32>
    %5 = vector.broadcast %4 : vector<1x512xf32> to vector<8x512xf32>
    %6 = arith.addf %3, %5 : vector<8x512xf32>
    %c0_6 = arith.constant 0 : index
    %c0_7 = arith.constant 0 : index
    %c0_8 = arith.constant 0 : index
    %7 = vector.load %arg6[%c0_6, %c0_7, %c0_8] : memref<1x1x128xf32, #tpu.memory_space<vmem>>, vector<1x1x128xf32>
    %8 = vector.shape_cast %7 : vector<1x1x128xf32> to vector<1x128xf32>
    %c0_9 = arith.constant 0 : index
    %c0_10 = arith.constant 0 : index
    %c0_11 = arith.constant 0 : index
    %9 = vector.load %arg7[%c0_9, %c0_10, %c0_11] : memref<1x1x128xf32, #tpu.memory_space<vmem>>, vector<1x1x128xf32>
    %10 = vector.shape_cast %9 : vector<1x1x128xf32> to vector<1x128xf32>
    %11 = vector.extract_strided_slice %6 {offsets = [0, 0], sizes = [8, 128], strides = [1, 1]} : vector<8x512xf32> to vector<8x128xf32>
    %cst_12 = arith.constant dense<0.000000e+00> : vector<8xf32>
    %12 = vector.multi_reduction <add>, %11, %cst_12 [1] : vector<8x128xf32> to vector<8xf32>
    %13 = vector.shape_cast %12 : vector<8xf32> to vector<8x1xf32>
    %cst_13 = arith.constant 1.280000e+02 : f32
    %14 = vector.broadcast %cst_13 : f32 to vector<8x1xf32>
    %15 = arith.divf %13, %14 : vector<8x1xf32>
    %16 = vector.broadcast %15 : vector<8x1xf32> to vector<8x128xf32>
    %17 = arith.subf %11, %16 : vector<8x128xf32>
    %18 = arith.mulf %17, %17 : vector<8x128xf32>
    %cst_14 = arith.constant dense<0.000000e+00> : vector<8xf32>
    %19 = vector.multi_reduction <add>, %18, %cst_14 [1] : vector<8x128xf32> to vector<8xf32>
    %20 = vector.shape_cast %19 : vector<8xf32> to vector<8x1xf32>
    %cst_15 = arith.constant 1.280000e+02 : f32
    %21 = vector.broadcast %cst_15 : f32 to vector<8x1xf32>
    %22 = arith.divf %20, %21 : vector<8x1xf32>
    %23 = vector.broadcast %15 : vector<8x1xf32> to vector<8x128xf32>
    %24 = arith.subf %11, %23 : vector<8x128xf32>
    %cst_16 = arith.constant 9.99999974E-6 : f32
    %25 = vector.broadcast %cst_16 : f32 to vector<8x1xf32>
    %26 = arith.addf %22, %25 : vector<8x1xf32>
    %27 = math.rsqrt %26 : vector<8x1xf32>
    %28 = vector.broadcast %27 : vector<8x1xf32> to vector<8x128xf32>
    %29 = arith.mulf %24, %28 : vector<8x128xf32>
    %30 = vector.broadcast %8 : vector<1x128xf32> to vector<8x128xf32>
    %31 = arith.mulf %29, %30 : vector<8x128xf32>
    %32 = vector.broadcast %10 : vector<1x128xf32> to vector<8x128xf32>
    %33 = arith.addf %31, %32 : vector<8x128xf32>
    %c0_17 = arith.constant 0 : index
    %c0_18 = arith.constant 0 : index
    %34 = vector.load %arg8[%c0_17, %c0_18] : memref<8x512xf32, #tpu.memory_space<vmem>>, vector<8x128xf32>
    tpu.vector_store %arg8[%c0_17, %c0_18], %33 {strides = array<i32>} : memref<8x512xf32, #tpu.memory_space<vmem>>, vector<8x128xf32>,
    %35 = vector.extract_strided_slice %6 {offsets = [0, 128], sizes = [8, 128], strides = [1, 1]} : vector<8x512xf32> to vector<8x128xf32>
    %cst_19 = arith.constant dense<0.000000e+00> : vector<8xf32>
    %36 = vector.multi_reduction <add>, %35, %cst_19 [1] : vector<8x128xf32> to vector<8xf32>
    %37 = vector.shape_cast %36 : vector<8xf32> to vector<8x1xf32>
    %cst_20 = arith.constant 1.280000e+02 : f32
    %38 = vector.broadcast %cst_20 : f32 to vector<8x1xf32>
    %39 = arith.divf %37, %38 : vector<8x1xf32>
    %40 = vector.broadcast %39 : vector<8x1xf32> to vector<8x128xf32>
    %41 = arith.subf %35, %40 : vector<8x128xf32>
    %42 = arith.mulf %41, %41 : vector<8x128xf32>
    %cst_21 = arith.constant dense<0.000000e+00> : vector<8xf32>
    %43 = vector.multi_reduction <add>, %42, %cst_21 [1] : vector<8x128xf32> to vector<8xf32>
    %44 = vector.shape_cast %43 : vector<8xf32> to vector<8x1xf32>
    %cst_22 = arith.constant 1.280000e+02 : f32
    %45 = vector.broadcast %cst_22 : f32 to vector<8x1xf32>
    %46 = arith.divf %44, %45 : vector<8x1xf32>
    %47 = vector.broadcast %39 : vector<8x1xf32> to vector<8x128xf32>
    %48 = arith.subf %35, %47 : vector<8x128xf32>
    %cst_23 = arith.constant 9.99999974E-6 : f32
    %49 = vector.broadcast %cst_23 : f32 to vector<8x1xf32>
    %50 = arith.addf %46, %49 : vector<8x1xf32>
    %51 = math.rsqrt %50 : vector<8x1xf32>
    %52 = vector.broadcast %51 : vector<8x1xf32> to vector<8x128xf32>
    %53 = arith.mulf %48, %52 : vector<8x128xf32>
    %54 = vector.broadcast %8 : vector<1x128xf32> to vector<8x128xf32>
    %55 = arith.mulf %53, %54 : vector<8x128xf32>
    %56 = vector.broadcast %10 : vector<1x128xf32> to vector<8x128xf32>
    %57 = arith.addf %55, %56 : vector<8x128xf32>
    %c0_24 = arith.constant 0 : index
    %c128 = arith.constant 128 : index
    %58 = vector.load %arg8[%c0_24, %c128] : memref<8x512xf32, #tpu.memory_space<vmem>>, vector<8x128xf32>
    tpu.vector_store %arg8[%c0_24, %c128], %57 {strides = array<i32>} : memref<8x512xf32, #tpu.memory_space<vmem>>, vector<8x128xf32>,
    %59 = vector.extract_strided_slice %6 {offsets = [0, 256], sizes = [8, 128], strides = [1, 1]} : vector<8x512xf32> to vector<8x128xf32>
    %cst_25 = arith.constant dense<0.000000e+00> : vector<8xf32>
    %60 = vector.multi_reduction <add>, %59, %cst_25 [1] : vector<8x128xf32> to vector<8xf32>
    %61 = vector.shape_cast %60 : vector<8xf32> to vector<8x1xf32>
    %cst_26 = arith.constant 1.280000e+02 : f32
    %62 = vector.broadcast %cst_26 : f32 to vector<8x1xf32>
    %63 = arith.divf %61, %62 : vector<8x1xf32>
    %64 = vector.broadcast %63 : vector<8x1xf32> to vector<8x128xf32>
    %65 = arith.subf %59, %64 : vector<8x128xf32>
    %66 = arith.mulf %65, %65 : vector<8x128xf32>
    %cst_27 = arith.constant dense<0.000000e+00> : vector<8xf32>
    %67 = vector.multi_reduction <add>, %66, %cst_27 [1] : vector<8x128xf32> to vector<8xf32>
    %68 = vector.shape_cast %67 : vector<8xf32> to vector<8x1xf32>
    %cst_28 = arith.constant 1.280000e+02 : f32
    %69 = vector.broadcast %cst_28 : f32 to vector<8x1xf32>
    %70 = arith.divf %68, %69 : vector<8x1xf32>
    %71 = vector.broadcast %63 : vector<8x1xf32> to vector<8x128xf32>
    %72 = arith.subf %59, %71 : vector<8x128xf32>
    %cst_29 = arith.constant 9.99999974E-6 : f32
    %73 = vector.broadcast %cst_29 : f32 to vector<8x1xf32>
    %74 = arith.addf %70, %73 : vector<8x1xf32>
    %75 = math.rsqrt %74 : vector<8x1xf32>
    %76 = vector.broadcast %75 : vector<8x1xf32> to vector<8x128xf32>
    %77 = arith.mulf %72, %76 : vector<8x128xf32>
    %78 = vector.broadcast %8 : vector<1x128xf32> to vector<8x128xf32>
    %79 = arith.mulf %77, %78 : vector<8x128xf32>
    %80 = vector.broadcast %10 : vector<1x128xf32> to vector<8x128xf32>
    %81 = arith.addf %79, %80 : vector<8x128xf32>
    %c0_30 = arith.constant 0 : index
    %c256 = arith.constant 256 : index
    %82 = vector.load %arg8[%c0_30, %c256] : memref<8x512xf32, #tpu.memory_space<vmem>>, vector<8x128xf32>
    tpu.vector_store %arg8[%c0_30, %c256], %81 {strides = array<i32>} : memref<8x512xf32, #tpu.memory_space<vmem>>, vector<8x128xf32>,
    %83 = vector.extract_strided_slice %6 {offsets = [0, 384], sizes = [8, 128], strides = [1, 1]} : vector<8x512xf32> to vector<8x128xf32>
    %cst_31 = arith.constant dense<0.000000e+00> : vector<8xf32>
    %84 = vector.multi_reduction <add>, %83, %cst_31 [1] : vector<8x128xf32> to vector<8xf32>
    %85 = vector.shape_cast %84 : vector<8xf32> to vector<8x1xf32>
    %cst_32 = arith.constant 1.280000e+02 : f32
    %86 = vector.broadcast %cst_32 : f32 to vector<8x1xf32>
    %87 = arith.divf %85, %86 : vector<8x1xf32>
    %88 = vector.broadcast %87 : vector<8x1xf32> to vector<8x128xf32>
    %89 = arith.subf %83, %88 : vector<8x128xf32>
    %90 = arith.mulf %89, %89 : vector<8x128xf32>
    %cst_33 = arith.constant dense<0.000000e+00> : vector<8xf32>
    %91 = vector.multi_reduction <add>, %90, %cst_33 [1] : vector<8x128xf32> to vector<8xf32>
    %92 = vector.shape_cast %91 : vector<8xf32> to vector<8x1xf32>
    %cst_34 = arith.constant 1.280000e+02 : f32
    %93 = vector.broadcast %cst_34 : f32 to vector<8x1xf32>
    %94 = arith.divf %92, %93 : vector<8x1xf32>
    %95 = vector.broadcast %87 : vector<8x1xf32> to vector<8x128xf32>
    %96 = arith.subf %83, %95 : vector<8x128xf32>
    %cst_35 = arith.constant 9.99999974E-6 : f32
    %97 = vector.broadcast %cst_35 : f32 to vector<8x1xf32>
    %98 = arith.addf %94, %97 : vector<8x1xf32>
    %99 = math.rsqrt %98 : vector<8x1xf32>
    %100 = vector.broadcast %99 : vector<8x1xf32> to vector<8x128xf32>
    %101 = arith.mulf %96, %100 : vector<8x128xf32>
    %102 = vector.broadcast %8 : vector<1x128xf32> to vector<8x128xf32>
    %103 = arith.mulf %101, %102 : vector<8x128xf32>
    %104 = vector.broadcast %10 : vector<1x128xf32> to vector<8x128xf32>
    %105 = arith.addf %103, %104 : vector<8x128xf32>
    %c0_36 = arith.constant 0 : index
    %c384 = arith.constant 384 : index
    %106 = vector.load %arg8[%c0_36, %c384] : memref<8x512xf32, #tpu.memory_space<vmem>>, vector<8x128xf32>
    tpu.vector_store %arg8[%c0_36, %c384], %105 {strides = array<i32>} : memref<8x512xf32, #tpu.memory_space<vmem>>, vector<8x128xf32>,
    return
  }
  func.func @transform_0(%arg0: i32, %arg1: i32, %arg2: memref<3xi32, #tpu.memory_space<smem>>) -> (i32, i32, i32) {
    %0 = arith.index_cast %arg0 : i32 to index
    %1 = memref.load %arg2[%0] : memref<3xi32, #tpu.memory_space<smem>>
    %c0_i32 = arith.constant 0 : i32
    %c0_i32_0 = arith.constant 0 : i32
    return %1, %arg1, %c0_i32 : i32, i32, i32
  }
  func.func @transform_1(%arg0: i32, %arg1: i32, %arg2: memref<3xi32, #tpu.memory_space<smem>>) -> (i32, i32) {
    %c0_i32 = arith.constant 0 : i32
    %c0_i32_0 = arith.constant 0 : i32
    return %c0_i32, %arg0 : i32, i32
  }
  func.func @transform_2(%arg0: i32, %arg1: i32, %arg2: memref<3xi32, #tpu.memory_space<smem>>) -> (i32, i32) {
    %c0_i32 = arith.constant 0 : i32
    %c0_i32_0 = arith.constant 0 : i32
    return %c0_i32, %arg0 : i32, i32
  }
  func.func @transform_3(%arg0: i32, %arg1: i32, %arg2: memref<3xi32, #tpu.memory_space<smem>>) -> (i32, i32, i32) {
    %0 = arith.index_cast %arg0 : i32 to index
    %1 = memref.load %arg2[%0] : memref<3xi32, #tpu.memory_space<smem>>
    %c0_i32 = arith.constant 0 : i32
    %c0_i32_0 = arith.constant 0 : i32
    %c0_i32_1 = arith.constant 0 : i32
    return %1, %c0_i32, %c0_i32_0 : i32, i32, i32
  }
  func.func @transform_4(%arg0: i32, %arg1: i32, %arg2: memref<3xi32, #tpu.memory_space<smem>>) -> (i32, i32, i32) {
    %0 = arith.index_cast %arg0 : i32 to index
    %1 = memref.load %arg2[%0] : memref<3xi32, #tpu.memory_space<smem>>
    %c0_i32 = arith.constant 0 : i32
    %c0_i32_0 = arith.constant 0 : i32
    %c0_i32_1 = arith.constant 0 : i32
    return %1, %c0_i32, %c0_i32_0 : i32, i32, i32
  }
  func.func @transform_5(%arg0: i32, %arg1: i32, %arg2: memref<3xi32, #tpu.memory_space<smem>>) -> (i32, i32) {
    %c0_i32 = arith.constant 0 : i32
    return %arg1, %arg0 : i32, i32
  }
}

</mosaic_0001>

<llo_original>
// kernel: _multi_ip_forward.1
$region0: #{_multi_ip_forward.1}
  #allocation0 [shape = 'u32[]', space=smem, size = 0x4, offset = 0x4, fixed_abs, tag = 'smem constant byte address 0x4 - core index']
  #allocation1 [shape = 'u32[144,128]{1,0:T(1,128)}', space=vmem, size = 0x12000, scoped, tag = 'internal scratch']
  #allocation2 [shape = 's32[1]{0}', space=sflag, size = 0x4, scoped, tag = 'scoped memory for _multi_ip_forward.1']
  #allocation3 [shape = 'u8[512]{0}', space=smem, size = 0x200, scoped, tag = 'prefetched SMEM operand 0']
  %s0 = inlined_call_operand.vmem [shape: s32[3], index: 0, kind: input, shape index: {}]
  %s1 = inlined_call_operand.vmem [shape: bf16[2,8,32], index: 1, kind: input, shape index: {}]
  %s2 = inlined_call_operand.vmem [shape: bf16[32,1536], index: 2, kind: input, shape index: {}]
  %s3 = inlined_call_operand.vmem [shape: f32[1,1536], index: 3, kind: input, shape index: {}]
  %s4 = inlined_call_operand.vmem [shape: f32[2,1,128], index: 4, kind: input, shape index: {}]
  %s5 = inlined_call_operand.vmem [shape: f32[2,1,128], index: 5, kind: input, shape index: {}]
  %s6 = inlined_call_operand.vmem [shape: f32[8,1536], index: 6, kind: output, shape index: {}]
  %s7 = sld [smem:[#allocation0]]
  $region76: #{_multi_ip_forward.1} parent=0
    _
  %s9 = ssub.s32 1, %s7
  %s10 = scalar_select 0, %s9, %s7
  %s11 = sshll.u32 %s0, 4
  %s12 = int_to_ptr.vmem [resolvable:$true] %s11
  %14 = dma.vmem_to_smem %s12, 16, [#allocation3], [#allocation2]
  %15 = dma.done [#allocation2], 16
  %16 = sfence
  $region1: #{_multi_ip_forward.1} parent=0
    #allocation4 [shape = 'u8[65536]{0}', space=vmem, size = 0x10000, scoped, tag = 'input window, operand 2']
    loop: start=0, step=1, limit=5
    $region2: #{_multi_ip_forward.1} parent=1 // loop_pre_header
      _
    $region3: #{_multi_ip_forward.1} parent=1 // loop_header
      %s18 = sphi 0, %s22
      %p19 = scmp.ge.s32.totalorder %s18, 5
      %s25 = sphi 0, %s37
      %s26 = sphi 0, %s33
      %s27 = sphi 0, %s25
      %s28 = sphi 0, %s26
      %s29 = sphi 0, %s27
      %s30 = sphi 0, %s28
      %s44 = sphi 0, %s46
      %s47 = sphi 0, %s44
      %s48 = sphi 0, %s47
      %s64 = sphi 0, %s48
      %s70 = sphi 0, %s72
      %s73 = sphi 0, %s70
      %s74 = sphi 0, %s73
      %s90 = sphi 0, %s74
      %s96 = sphi 0, %s98
      %s99 = sphi 0, %s96
      %s100 = sphi 0, %s99
      %s116 = sphi 0, %s100
      %s124 = sphi 0, %s126
      %s127 = sphi 0, %s124
      %s128 = sphi 0, %s127
      %s144 = sphi 0, %s128
      %s152 = sphi 0, %s154
      %s155 = sphi 0, %s152
      %s156 = sphi 0, %s155
      %s172 = sphi 0, %s156
      %s180 = sphi 0, %s182
      %s183 = sphi 0, %s180
      %s184 = sphi 0, %s183
      %s200 = sphi 0, %s184
    $region4: #{_multi_ip_forward.1} parent=1 // loop_header_branch
      %21 = sbr.rel (%p19) target = $region8
    $region5: #{_multi_ip_forward.1} parent=1 // loop_body
      %s23 = ssub.s32 %s18, 1
      %s24 = ssub.s32 %s18, 2
      %s31 = sadd.s32 1, %s26
      %p32 = scmp.ge.s32.totalorder %s31, 1
      %s33 = scalar_select %p32, 0, %s31
      %s34 = sadd.s32 1, %s25
      %s35 = scalar_select %p32, %s34, %s25
      %p36 = scmp.ge.s32.totalorder %s35, 3
      %s37 = scalar_select %p36, 0, %s35
      %s38 = sld [smem:[#allocation3 + %s25]]
      %s39 = sld [smem:[#allocation3 + %s37]]
      %s40 = ssub.s32 %s38, %s39
      %s41 = ssub.s32 %s26, %s33
      %s42 = sor.u32 %s40, %s41
      %p43 = scmp.eq.s32.totalorder %s42, 0
      %s45 = sadd.s32 %s44, 1
      %s46 = scalar_select %p43, %s44, %s45
      %p49 = pneg %p43
      %p50 = scmp.eq.s32.totalorder %s18, 2
      %p51 = por %p49, %p50
      %p52 = scmp.ne.s32.totalorder %s44, %s47
      %p53 = scmp.eq.s32.totalorder %s18, 0
      %p54 = por %p52, %p53
      %p55 = scmp.ne.s32.totalorder %s44, %s47
      %p56 = scmp.eq.s32.totalorder %s23, 2
      %p57 = por %p55, %p56
      %p58 = scmp.ne.s32.totalorder %s47, %s48
      %p59 = scmp.eq.s32.totalorder %s23, 0
      %p60 = por %p58, %p59
      %p61 = scmp.ne.s32.totalorder %s47, %s48
      %p62 = scmp.eq.s32.totalorder %s24, 2
      %p63 = por %p61, %p62
      %p65 = scmp.ne.s32.totalorder %s48, %s64
      %p66 = scmp.eq.s32.totalorder %s24, 0
      %p67 = por %p65, %p66
      %s68 = ssub.s32 %s25, %s37
      %p69 = scmp.eq.s32.totalorder %s68, 0
      %s71 = sadd.s32 %s70, 1
      %s72 = scalar_select %p69, %s70, %s71
      %p75 = pneg %p69
      %p76 = scmp.eq.s32.totalorder %s18, 2
      %p77 = por %p75, %p76
      %p78 = scmp.ne.s32.totalorder %s70, %s73
      %p79 = scmp.eq.s32.totalorder %s18, 0
      %p80 = por %p78, %p79
      %p81 = scmp.ne.s32.totalorder %s70, %s73
      %p82 = scmp.eq.s32.totalorder %s23, 2
      %p83 = por %p81, %p82
      %p84 = scmp.ne.s32.totalorder %s73, %s74
      %p85 = scmp.eq.s32.totalorder %s23, 0
      %p86 = por %p84, %p85
      %p87 = scmp.ne.s32.totalorder %s73, %s74
      %p88 = scmp.eq.s32.totalorder %s24, 2
      %p89 = por %p87, %p88
      %p91 = scmp.ne.s32.totalorder %s74, %s90
      %p92 = scmp.eq.s32.totalorder %s24, 0
      %p93 = por %p91, %p92
      %s94 = ssub.s32 %s25, %s37
      %p95 = scmp.eq.s32.totalorder %s94, 0
      %s97 = sadd.s32 %s96, 1
      %s98 = scalar_select %p95, %s96, %s97
      %p101 = pneg %p95
      %p102 = scmp.eq.s32.totalorder %s18, 2
      %p103 = por %p101, %p102
      %p104 = scmp.ne.s32.totalorder %s96, %s99
      %p105 = scmp.eq.s32.totalorder %s18, 0
      %p106 = por %p104, %p105
      %p107 = scmp.ne.s32.totalorder %s96, %s99
      %p108 = scmp.eq.s32.totalorder %s23, 2
      %p109 = por %p107, %p108
      %p110 = scmp.ne.s32.totalorder %s99, %s100
      %p111 = scmp.eq.s32.totalorder %s23, 0
      %p112 = por %p110, %p111
      %p113 = scmp.ne.s32.totalorder %s99, %s100
      %p114 = scmp.eq.s32.totalorder %s24, 2
      %p115 = por %p113, %p114
      %p117 = scmp.ne.s32.totalorder %s100, %s116
      %p118 = scmp.eq.s32.totalorder %s24, 0
      %p119 = por %p117, %p118
      %s120 = sld [smem:[#allocation3 + %s25]]
      %s121 = sld [smem:[#allocation3 + %s37]]
      %s122 = ssub.s32 %s120, %s121
      %p123 = scmp.eq.s32.totalorder %s122, 0
      %s125 = sadd.s32 %s124, 1
      %s126 = scalar_select %p123, %s124, %s125
      %p129 = pneg %p123
      %p130 = scmp.eq.s32.totalorder %s18, 2
      %p131 = por %p129, %p130
      %p132 = scmp.ne.s32.totalorder %s124, %s127
      %p133 = scmp.eq.s32.totalorder %s18, 0
      %p134 = por %p132, %p133
      %p135 = scmp.ne.s32.totalorder %s124, %s127
      %p136 = scmp.eq.s32.totalorder %s23, 2
      %p137 = por %p135, %p136
      %p138 = scmp.ne.s32.totalorder %s127, %s128
      %p139 = scmp.eq.s32.totalorder %s23, 0
      %p140 = por %p138, %p139
      %p141 = scmp.ne.s32.totalorder %s127, %s128
      %p142 = scmp.eq.s32.totalorder %s24, 2
      %p143 = por %p141, %p142
      %p145 = scmp.ne.s32.totalorder %s128, %s144
      %p146 = scmp.eq.s32.totalorder %s24, 0
      %p147 = por %p145, %p146
      %s148 = sld [smem:[#allocation3 + %s25]]
      %s149 = sld [smem:[#allocation3 + %s37]]
      %s150 = ssub.s32 %s148, %s149
      %p151 = scmp.eq.s32.totalorder %s150, 0
      %s153 = sadd.s32 %s152, 1
      %s154 = scalar_select %p151, %s152, %s153
      %p157 = pneg %p151
      %p158 = scmp.eq.s32.totalorder %s18, 2
      %p159 = por %p157, %p158
      %p160 = scmp.ne.s32.totalorder %s152, %s155
      %p161 = scmp.eq.s32.totalorder %s18, 0
      %p162 = por %p160, %p161
      %p163 = scmp.ne.s32.totalorder %s152, %s155
      %p164 = scmp.eq.s32.totalorder %s23, 2
      %p165 = por %p163, %p164
      %p166 = scmp.ne.s32.totalorder %s155, %s156
      %p167 = scmp.eq.s32.totalorder %s23, 0
      %p168 = por %p166, %p167
      %p169 = scmp.ne.s32.totalorder %s155, %s156
      %p170 = scmp.eq.s32.totalorder %s24, 2
      %p171 = por %p169, %p170
      %p173 = scmp.ne.s32.totalorder %s156, %s172
      %p174 = scmp.eq.s32.totalorder %s24, 0
      %p175 = por %p173, %p174
      %s176 = ssub.s32 %s26, %s33
      %s177 = ssub.s32 %s25, %s37
      %s178 = sor.u32 %s176, %s177
      %p179 = scmp.eq.s32.totalorder %s178, 0
      %s181 = sadd.s32 %s180, 1
      %s182 = scalar_select %p179, %s180, %s181
      %p185 = pneg %p179
      %p186 = scmp.eq.s32.totalorder %s18, 2
      %p187 = por %p185, %p186
      %p188 = scmp.ne.s32.totalorder %s180, %s183
      %p189 = scmp.eq.s32.totalorder %s18, 0
      %p190 = por %p188, %p189
      %p191 = scmp.ne.s32.totalorder %s180, %s183
      %p192 = scmp.eq.s32.totalorder %s23, 2
      %p193 = por %p191, %p192
      %p194 = scmp.ne.s32.totalorder %s183, %s184
      %p195 = scmp.eq.s32.totalorder %s23, 0
      %p196 = por %p194, %p195
      %p197 = scmp.ne.s32.totalorder %s183, %s184
      %p198 = scmp.eq.s32.totalorder %s24, 2
      %p199 = por %p197, %p198
      %p201 = scmp.ne.s32.totalorder %s184, %s200
      %p202 = scmp.eq.s32.totalorder %s24, 0
      %p203 = por %p201, %p202
      %p204 = scmp.le.s32.totalorder 1, %s18
      %p205 = scmp.lt.s32.totalorder %s18, 4
      %p206 = pnand %p204, %p205
      %p207 = pneg %p206
      // Predicated region
      $region9: #{_multi_ip_forward.1} parent=5 // pred_check
        _
      $region10: #{_multi_ip_forward.1} parent=5 // pred_check_branch
        %209 = sbr.rel (%p206) target = $region12
      $region11: #{_multi_ip_forward.1} parent=5 // pred_region
        %s210 = ssub.s32 %s18, 1
      $region12: #{_multi_ip_forward.1} parent=5 // pred_fallthru
        _
      %p211 = scmp.lt.s32.totalorder %s18, 3
      // Predicated region
      $region13: #{_multi_ip_forward.1} parent=5 // pred_check
        %p212 = pneg %p211
      $region14: #{_multi_ip_forward.1} parent=5 // pred_check_branch
        %214 = sbr.rel (%p212) target = $region16
      $region15: #{_multi_ip_forward.1} parent=5 // pred_region
        // Predicated region
        $region17: #{_multi_ip_forward.1} parent=15 // pred_check
          %p215 = pneg %p54
        $region18: #{_multi_ip_forward.1} parent=15 // pred_check_branch
          %217 = sbr.rel (%p215) target = $region20
        $region19: #{_multi_ip_forward.1} parent=15 // pred_region
          %s218 = sld [smem:[#allocation3 + %s25]]
          %p219 = scmp.lt.s32.totalorder %s218, 1
          %s220 = scalar_select %p219, %s218, 1
          %p221 = scmp.lt.s32.totalorder %s26, 0
          %s222 = scalar_select %p221, %s26, 0
          %s223 = sadd.s32 %s222, %s220
          %s224 = smul.addr %s223, 4
          %s225 = scalar_lea.vmem %s1, %s224
          %s226 = sld [smem:[#allocation3 + %s25]]
        $region20: #{_multi_ip_forward.1} parent=15 // pred_fallthru
          _
        // Predicated region
        $region21: #{_multi_ip_forward.1} parent=15 // pred_check
          %p227 = pneg %p80
        $region22: #{_multi_ip_forward.1} parent=15 // pred_check_branch
          %229 = sbr.rel (%p227) target = $region24
        $region23: #{_multi_ip_forward.1} parent=15 // pred_region
          %s230 = sand.u32 %s70, 1
          %s231 = sand.u32 %s70, 1
          %s232 = smul.addr %s231, 64
          %s233 = scalar_lea.vmem [#allocation4], %s232
          %s234 = smul.u32 4, %s25
          %s235 = smul.addr %s234, 4
          %s236 = scalar_lea.vmem %s2, %s235
          // Predicated region
          $region25: #{_multi_ip_forward.1} parent=23 // pred_check
            _
          $region26: #{_multi_ip_forward.1} parent=23 // pred_check_branch
            %238 = sbr.rel (0) target = $region28
          $region27: #{_multi_ip_forward.1} parent=23 // pred_region
            // Predicated region
            $region29: #{_multi_ip_forward.1} parent=27 // pred_check
              _
            $region30: #{_multi_ip_forward.1} parent=27 // pred_check_branch
              %240 = sbr.rel (0) target = $region32
            $region31: #{_multi_ip_forward.1} parent=27 // pred_region
              loop: start=0, step=1, limit=1
              $region33: #{_multi_ip_forward.1} parent=31 // loop_pre_header
                _
              $region34: #{_multi_ip_forward.1} parent=31 // loop_header
                %s242 = sphi 0, %s246
                %p243 = scmp.ge.s32.totalorder %s242, 1
                %s247 = sphi %s236, %s236
                %s248 = sphi %s233, %s233
              $region35: #{_multi_ip_forward.1} parent=31 // loop_header_branch
                %245 = sbr.rel (%p243) target = $region39
              $region36: #{_multi_ip_forward.1} parent=31 // loop_body
                %v249 = vld [vmem:[%s247] sm:$0xff]
                %250 = vst [vmem:[%s248] sm:$0xff] %v249
                %v251 = vld [vmem:[%s247 + $0x8] sm:$0xff]
                %252 = vst [vmem:[%s248 + $0x8] sm:$0xff] %v251
                %v253 = vld [vmem:[%s247 + $0x30] sm:$0xff]
                %254 = vst [vmem:[%s248 + $0x10] sm:$0xff] %v253
                %v255 = vld [vmem:[%s247 + $0x38] sm:$0xff]
                %256 = vst [vmem:[%s248 + $0x18] sm:$0xff] %v255
                %v257 = vld [vmem:[%s247 + $0x60] sm:$0xff]
                %258 = vst [vmem:[%s248 + $0x20] sm:$0xff] %v257
                %v259 = vld [vmem:[%s247 + $0x68] sm:$0xff]
                %260 = vst [vmem:[%s248 + $0x28] sm:$0xff] %v259
                %v261 = vld [vmem:[%s247 + $0x90] sm:$0xff]
                %262 = vst [vmem:[%s248 + $0x30] sm:$0xff] %v261
                %v263 = vld [vmem:[%s247 + $0x98] sm:$0xff]
                %264 = vst [vmem:[%s248 + $0x38] sm:$0xff] %v263
              $region37: #{_multi_ip_forward.1} parent=31 // loop_footer
                %s246 = sadd.s32 1, %s242
              $region38: #{_multi_ip_forward.1} parent=31 // loop_footer_branch
                %241 = sbr.rel target = $region34
              $region39: #{_multi_ip_forward.1} parent=31 // loop_exit
                _
            $region32: #{_multi_ip_forward.1} parent=27 // pred_fallthru
              _
            // Predicated region
            $region40: #{_multi_ip_forward.1} parent=27 // pred_check
              _
            $region41: #{_multi_ip_forward.1} parent=27 // pred_check_branch
              %266 = sbr.rel target = $region43
            $region42: #{_multi_ip_forward.1} parent=27 // pred_region
              _
            $region43: #{_multi_ip_forward.1} parent=27 // pred_fallthru
              _
          $region28: #{_multi_ip_forward.1} parent=23 // pred_fallthru
            _
          %267 = vnop
        $region24: #{_multi_ip_forward.1} parent=15 // pred_fallthru
          _
        // Predicated region
        $region44: #{_multi_ip_forward.1} parent=15 // pred_check
          %p268 = pneg %p106
        $region45: #{_multi_ip_forward.1} parent=15 // pred_check_branch
          %270 = sbr.rel (%p268) target = $region47
        $region46: #{_multi_ip_forward.1} parent=15 // pred_region
          %s271 = smul.u32 4, %s25
          %p272 = scmp.lt.s32.totalorder %s271, 11
          %s273 = scalar_select %p272, %s271, 11
          %s274 = scalar_lea.vmem %s3, %s273
          %s275 = smul.u32 4, %s25
        $region47: #{_multi_ip_forward.1} parent=15 // pred_fallthru
          _
        // Predicated region
        $region48: #{_multi_ip_forward.1} parent=15 // pred_check
          %p276 = pneg %p134
        $region49: #{_multi_ip_forward.1} parent=15 // pred_check_branch
          %278 = sbr.rel (%p276) target = $region51
        $region50: #{_multi_ip_forward.1} parent=15 // pred_region
          %s279 = sld [smem:[#allocation3 + %s25]]
          %p280 = scmp.lt.s32.totalorder %s279, 1
          %s281 = scalar_select %p280, %s279, 1
          %s282 = scalar_lea.vmem %s4, %s281
          %s283 = sld [smem:[#allocation3 + %s25]]
        $region51: #{_multi_ip_forward.1} parent=15 // pred_fallthru
          _
        // Predicated region
        $region52: #{_multi_ip_forward.1} parent=15 // pred_check
          %p284 = pneg %p162
        $region53: #{_multi_ip_forward.1} parent=15 // pred_check_branch
          %286 = sbr.rel (%p284) target = $region55
        $region54: #{_multi_ip_forward.1} parent=15 // pred_region
          %s287 = sld [smem:[#allocation3 + %s25]]
          %p288 = scmp.lt.s32.totalorder %s287, 1
          %s289 = scalar_select %p288, %s287, 1
          %s290 = scalar_lea.vmem %s5, %s289
          %s291 = sld [smem:[#allocation3 + %s25]]
        $region55: #{_multi_ip_forward.1} parent=15 // pred_fallthru
          _
      $region16: #{_multi_ip_forward.1} parent=5 // pred_fallthru
        _
      %p292 = scmp.le.s32.totalorder 1, %s18
      %p293 = scmp.lt.s32.totalorder %s18, 4
      %p294 = pnand %p292, %p293
      %p295 = pneg %p294
      // Predicated region
      $region56: #{_multi_ip_forward.1} parent=5 // pred_check
        _
      $region57: #{_multi_ip_forward.1} parent=5 // pred_check_branch
        %297 = sbr.rel (%p294) target = $region59
      $region58: #{_multi_ip_forward.1} parent=5 // pred_region
        %s298 = ssub.s32 %s18, 1
        %s299 = sand.u32 %s73, 1
        %s300 = sand.u32 %s73, 1
        %s301 = smul.addr %s300, 64
        %s302 = scalar_lea.vmem [#allocation4], %s301
        // Predicated region
        $region60: #{_multi_ip_forward.1} parent=58 // pred_check
          %p303 = pneg %p86
        $region61: #{_multi_ip_forward.1} parent=58 // pred_check_branch
          %305 = sbr.rel (%p303) target = $region63
        $region62: #{_multi_ip_forward.1} parent=58 // pred_region
          _
        $region63: #{_multi_ip_forward.1} parent=58 // pred_fallthru
          _
        %s306 = sld [smem:[#allocation3 + %s27]]
        %p307 = scmp.lt.s32.totalorder %s306, 1
        %s308 = scalar_select %p307, %s306, 1
        %p309 = scmp.lt.s32.totalorder %s28, 0
        %s310 = scalar_select %p309, %s28, 0
        %s311 = sadd.s32 %s310, %s308
        %s312 = smul.addr %s311, 4
        %s313 = scalar_lea.vmem %s1, %s312
        %p314 = pneg %p60
        %p315 = pneg %p57
        %s316 = sand.u32 %s73, 1
        %s317 = sand.u32 %s73, 1
        %s318 = smul.addr %s317, 64
        %s319 = scalar_lea.vmem [#allocation4], %s318
        %p320 = pneg %p86
        %p321 = pneg %p83
        %s322 = smul.u32 4, %s27
        %p323 = scmp.lt.s32.totalorder %s322, 11
        %s324 = scalar_select %p323, %s322, 11
        %s325 = scalar_lea.vmem %s3, %s324
        %p326 = pneg %p112
        %p327 = pneg %p109
        %s328 = sld [smem:[#allocation3 + %s27]]
        %p329 = scmp.lt.s32.totalorder %s328, 1
        %s330 = scalar_select %p329, %s328, 1
        %s331 = scalar_lea.vmem %s4, %s330
        %p332 = pneg %p140
        %p333 = pneg %p137
        %s334 = sld [smem:[#allocation3 + %s27]]
        %p335 = scmp.lt.s32.totalorder %s334, 1
        %s336 = scalar_select %p335, %s334, 1
        %s337 = scalar_lea.vmem %s5, %s336
        %p338 = pneg %p168
        %p339 = pneg %p165
        %p340 = pneg %p196
        %p341 = pneg %p193
        %s342 = smul.u32 4, %s27
        %p343 = scmp.lt.s32.totalorder %s28, 0
        %s344 = scalar_select %p343, %s28, 0
        %p345 = scmp.lt.s32.totalorder %s342, 11
        %s346 = scalar_select %p345, %s342, 11
        %s347 = smul.addr %s344, 12
        %s348 = sadd.s32 %s346, %s347
        %s349 = smul.addr %s348, 8
        %s350 = scalar_lea.vmem %s6, %s349
        %s351 = sld [smem:[#allocation3 + %s27]]
        %p352 = scmp.lt.s32.totalorder %s351, 1
        %s353 = scalar_select %p352, %s351, 1
        %p354 = scmp.lt.s32.totalorder %s28, 0
        %s355 = scalar_select %p354, %s28, 0
        %s356 = sadd.s32 %s355, %s353
        %s357 = smul.addr %s356, 4
        %s358 = scalar_lea.vmem %s1, %s357
        %s359 = sld [smem:[#allocation3 + %s27]]
        %s360 = smul.u32 4, %s27
        %s361 = smul.u32 4, %s27
        %p362 = scmp.lt.s32.totalorder %s361, 11
        %s363 = scalar_select %p362, %s361, 11
        %s364 = scalar_lea.vmem %s3, %s363
        %s365 = smul.u32 4, %s27
        %s366 = sld [smem:[#allocation3 + %s27]]
        %p367 = scmp.lt.s32.totalorder %s366, 1
        %s368 = scalar_select %p367, %s366, 1
        %s369 = scalar_lea.vmem %s4, %s368
        %s370 = sld [smem:[#allocation3 + %s27]]
        %s371 = sld [smem:[#allocation3 + %s27]]
        %p372 = scmp.lt.s32.totalorder %s371, 1
        %s373 = scalar_select %p372, %s371, 1
        %s374 = scalar_lea.vmem %s5, %s373
        %s375 = sld [smem:[#allocation3 + %s27]]
        %s376 = smul.u32 4, %s27
        %p377 = scmp.lt.s32.totalorder %s28, 0
        %s378 = scalar_select %p377, %s28, 0
        %p379 = scmp.lt.s32.totalorder %s376, 11
        %s380 = scalar_select %p379, %s376, 11
        %s381 = smul.addr %s378, 12
        %s382 = sadd.s32 %s380, %s381
        %s383 = smul.addr %s382, 8
        %s384 = scalar_lea.vmem %s6, %s383
        %s385 = smul.u32 4, %s27
        %v387 = vld [vmem:[%s358] sm:$0xf]
        %v388 = vld [vmem:[%s302] sm:$0xff]
        %v389 = vld [vmem:[%s302 + $0x8] sm:$0xff]
        %v390 = vld [vmem:[%s302 + $0x10] sm:$0xff]
        %v391 = vld [vmem:[%s302 + $0x18] sm:$0xff]
        %v392 = vld [vmem:[%s302 + $0x20] sm:$0xff]
        %v393 = vld [vmem:[%s302 + $0x28] sm:$0xff]
        %v394 = vld [vmem:[%s302 + $0x30] sm:$0xff]
        %v395 = vld [vmem:[%s302 + $0x38] sm:$0xff]
        %v396 = vld [vmem:[%s364] sm:$0xf]
        %v398 = vlaneseq
        %v399 = vshrl.u32 %v398, 7
        %v400 = vsub.s32 0, %v399
        %v401 = vrot.slane %v396, %v400
        %v402 = vlaneseq
        %v403 = vshrl.u32 %v402, 7
        %v404 = vsub.s32 1, %v403
        %v405 = vrot.slane %v396, %v404
        %v406 = vlaneseq
        %v407 = vshrl.u32 %v406, 7
        %v408 = vsub.s32 2, %v407
        %v409 = vrot.slane %v396, %v408
        %v410 = vlaneseq
        %v411 = vshrl.u32 %v410, 7
        %v412 = vsub.s32 3, %v411
        %v413 = vrot.slane %v396, %v412
        %v426 = vunpack.c.l.b16 %v388
        %v427 = vunpack.c.h.b16 %v388
        %v428 = vunpack.c.l.b16 %v389
        %v429 = vunpack.c.h.b16 %v389
        %v430 = vunpack.c.l.b16 %v390
        %v431 = vunpack.c.h.b16 %v390
        %v432 = vunpack.c.l.b16 %v391
        %v433 = vunpack.c.h.b16 %v391
        %v434 = vunpack.c.l.b16 %v392
        %v435 = vunpack.c.h.b16 %v392
        %v436 = vunpack.c.l.b16 %v393
        %v437 = vunpack.c.h.b16 %v393
        %v438 = vunpack.c.l.b16 %v394
        %v439 = vunpack.c.h.b16 %v394
        %v440 = vunpack.c.l.b16 %v395
        %v441 = vunpack.c.h.b16 %v395
        %v442 = vpack.c.b16 %v430, %v426
        %v443 = vpack.c.b16 %v431, %v427
        %v444 = vpack.c.b16 %v432, %v428
        %v445 = vpack.c.b16 %v433, %v429
        %v446 = vpack.c.b16 %v438, %v434
        %v447 = vpack.c.b16 %v439, %v435
        %v448 = vpack.c.b16 %v440, %v436
        %v449 = vpack.c.b16 %v441, %v437
        %vm458 = vcmask 261120
        %v460 = vsel %vm458, %v387, 0
        %462 = vmatprep.subr.bf16.mxu0 %v443
        %463 = vmatpush1.bf16.msra.mxu0 %v442
        %464 = vmatprep.subr.bf16.mxu0 %v447
        %465 = vmatpush1.bf16.msra.mxu0 %v446
        %466 = vmatprep.subr.bf16.mxu0 0
        %467 = vmatpush1.bf16.msra.mxu0 0
        %468 = vmatprep.subr.bf16.mxu0 0
        %469 = vmatpush1.bf16.msra.mxu0 0
        %470 = vmatprep.subr.bf16.mxu0 0
        %471 = vmatpush1.bf16.msra.mxu0 0
        %472 = vmatprep.subr.bf16.mxu0 0
        %473 = vmatpush1.bf16.msra.mxu0 0
        %474 = vmatprep.subr.bf16.mxu0 0
        %475 = vmatpush1.bf16.msra.mxu0 0
        %476 = vmatprep.subr.bf16.mxu0 0
        %477 = vmatpush1.bf16.msra.mxu0 0
        %478 = vmatprep.subr.bf16.mxu0 0
        %479 = vmatpush1.bf16.msra.mxu0 0
        %480 = vmatprep.subr.bf16.mxu0 0
        %481 = vmatpush1.bf16.msra.mxu0 0
        %482 = vmatprep.subr.bf16.mxu0 0
        %483 = vmatpush1.bf16.msra.mxu0 0
        %484 = vmatprep.subr.bf16.mxu0 0
        %485 = vmatpush1.bf16.msra.mxu0 0
        %486 = vmatprep.subr.bf16.mxu0 0
        %487 = vmatpush1.bf16.msra.mxu0 0
        %488 = vmatprep.subr.bf16.mxu0 0
        %489 = vmatpush1.bf16.msra.mxu0 0
        %490 = vmatprep.subr.bf16.mxu0 0
        %491 = vmatpush1.bf16.msra.mxu0 0
        %492 = vmatprep.subr.bf16.mxu0 0
        %493 = vmatpush1.bf16.msra.mxu0 0
        %494 = vmatprep.mubr.bf16.mxu0 0
        %495 = vmatmul.mubr.bf16.gmra.mrb[0].mxu0 %v460
        %v496 = vpop.f32.mrb[0].mxu0
        %v497 = vadd.f32 %v401, %v496
        %v498 = vpop.f32.mrb[0].mxu0
        %v499 = vadd.f32 %v405, %v498
        %v500 = vpop.f32.mrb[0].mxu0
        %v501 = vpop.f32.mrb[0].mxu0
        %502 = vdwg.mxu0
        %503 = vmatprep.subr.bf16.mxu0 %v445
        %504 = vmatpush1.bf16.msra.mxu0 %v444
        %505 = vmatprep.subr.bf16.mxu0 %v449
        %506 = vmatpush1.bf16.msra.mxu0 %v448
        %507 = vmatprep.subr.bf16.mxu0 0
        %508 = vmatpush1.bf16.msra.mxu0 0
        %509 = vmatprep.subr.bf16.mxu0 0
        %510 = vmatpush1.bf16.msra.mxu0 0
        %511 = vmatprep.subr.bf16.mxu0 0
        %512 = vmatpush1.bf16.msra.mxu0 0
        %513 = vmatprep.subr.bf16.mxu0 0
        %514 = vmatpush1.bf16.msra.mxu0 0
        %515 = vmatprep.subr.bf16.mxu0 0
        %516 = vmatpush1.bf16.msra.mxu0 0
        %517 = vmatprep.subr.bf16.mxu0 0
        %518 = vmatpush1.bf16.msra.mxu0 0
        %519 = vmatprep.subr.bf16.mxu0 0
        %520 = vmatpush1.bf16.msra.mxu0 0
        %521 = vmatprep.subr.bf16.mxu0 0
        %522 = vmatpush1.bf16.msra.mxu0 0
        %523 = vmatprep.subr.bf16.mxu0 0
        %524 = vmatpush1.bf16.msra.mxu0 0
        %525 = vmatprep.subr.bf16.mxu0 0
        %526 = vmatpush1.bf16.msra.mxu0 0
        %527 = vmatprep.subr.bf16.mxu0 0
        %528 = vmatpush1.bf16.msra.mxu0 0
        %529 = vmatprep.subr.bf16.mxu0 0
        %530 = vmatpush1.bf16.msra.mxu0 0
        %531 = vmatprep.subr.bf16.mxu0 0
        %532 = vmatpush1.bf16.msra.mxu0 0
        %533 = vmatprep.subr.bf16.mxu0 0
        %534 = vmatpush1.bf16.msra.mxu0 0
        %535 = vmatprep.mubr.bf16.mxu0 0
        %536 = vmatmul.mubr.bf16.gmra.mrb[0].mxu0 %v460
        %v537 = vpop.f32.mrb[0].mxu0
        %v538 = vadd.f32 %v409, %v537
        %v539 = vpop.f32.mrb[0].mxu0
        %v540 = vadd.f32 %v413, %v539
        %v541 = vpop.f32.mrb[0].mxu0
        %v542 = vpop.f32.mrb[0].mxu0
        %543 = vdwg.mxu0
        %v544 = vld [vmem:[%s369] sm:$0x1]
        %v545 = vld [vmem:[%s374] sm:$0x1]
        %546 = vadd.xlane.f32.xlu0 %v497
        %v547 = vpop.xlane.xlu0 %546
        %v548 = vrcp.pop 128.0
        %v549 = vmul.f32 %v547, %v548
        %v550 = vsub.f32 %v497, %v549
        %v551 = vmul.f32 %v550, %v550
        %552 = vadd.xlane.f32.xlu0 %v551
        %v553 = vpop.xlane.xlu0 %552
        %v554 = vmul.f32 %v553, %v548
        %v555 = vadd.f32 %v554, 1e-05
        %v556 = vrsqrt.pop %v555
        %v557 = vmul.f32 %v550, %v556
        %v559 = vlaneseq
        %v560 = vshrl.u32 %v559, 7
        %v561 = vsub.s32 0, %v560
        %v562 = vrot.slane %v544, %v561
        %v564 = vmul.f32 %v557, %v562
        %v566 = vlaneseq
        %v567 = vshrl.u32 %v566, 7
        %v568 = vsub.s32 0, %v567
        %v569 = vrot.slane %v545, %v568
        %v571 = vadd.f32 %v564, %v569
        %572 = vst [vmem:[%s384] sm:$0xff] %v571
        %573 = vadd.xlane.f32.xlu0 %v499
        %v574 = vpop.xlane.xlu0 %573
        %v575 = vmul.f32 %v574, %v548
        %v576 = vsub.f32 %v499, %v575
        %v577 = vmul.f32 %v576, %v576
        %578 = vadd.xlane.f32.xlu0 %v577
        %v579 = vpop.xlane.xlu0 %578
        %v580 = vmul.f32 %v579, %v548
        %v581 = vadd.f32 %v580, 1e-05
        %v582 = vrsqrt.pop %v581
        %v583 = vmul.f32 %v576, %v582
        %v584 = vmul.f32 %v583, %v562
        %v585 = vadd.f32 %v584, %v569
        %586 = vst [vmem:[%s384 + $0x8] sm:$0xff] %v585
        %587 = vadd.xlane.f32.xlu0 %v538
        %v588 = vpop.xlane.xlu0 %587
        %v589 = vmul.f32 %v588, %v548
        %v590 = vsub.f32 %v538, %v589
        %v591 = vmul.f32 %v590, %v590
        %592 = vadd.xlane.f32.xlu0 %v591
        %v593 = vpop.xlane.xlu0 %592
        %v594 = vmul.f32 %v593, %v548
        %v595 = vadd.f32 %v594, 1e-05
        %v596 = vrsqrt.pop %v595
        %v597 = vmul.f32 %v590, %v596
        %v598 = vmul.f32 %v597, %v562
        %v599 = vadd.f32 %v598, %v569
        %600 = vst [vmem:[%s384 + $0x10] sm:$0xff] %v599
        %601 = vadd.xlane.f32.xlu0 %v540
        %v602 = vpop.xlane.xlu0 %601
        %v603 = vmul.f32 %v602, %v548
        %v604 = vsub.f32 %v540, %v603
        %v605 = vmul.f32 %v604, %v604
        %606 = vadd.xlane.f32.xlu0 %v605
        %v607 = vpop.xlane.xlu0 %606
        %v608 = vmul.f32 %v607, %v548
        %v609 = vadd.f32 %v608, 1e-05
        %v610 = vrsqrt.pop %v609
        %v611 = vmul.f32 %v604, %v610
        %v612 = vmul.f32 %v611, %v562
        %v613 = vadd.f32 %v612, %v569
        %614 = vst [vmem:[%s384 + $0x18] sm:$0xff] %v613
        %s615 = smul.u32 4, %s27
        %p616 = scmp.lt.s32.totalorder %s28, 0
        %s617 = scalar_select %p616, %s28, 0
        %p618 = scmp.lt.s32.totalorder %s615, 11
        %s619 = scalar_select %p618, %s615, 11
        %s620 = smul.addr %s617, 12
        %s621 = sadd.s32 %s619, %s620
        %s622 = smul.addr %s621, 8
        %s623 = scalar_lea.vmem %s6, %s622
        // Predicated region
        $region64: #{_multi_ip_forward.1} parent=58 // pred_check
          %p624 = pneg %p193
        $region65: #{_multi_ip_forward.1} parent=58 // pred_check_branch
          %626 = sbr.rel (%p624) target = $region67
        $region66: #{_multi_ip_forward.1} parent=58 // pred_region
          %s627 = smul.u32 4, %s27
        $region67: #{_multi_ip_forward.1} parent=58 // pred_fallthru
          _
      $region59: #{_multi_ip_forward.1} parent=5 // pred_fallthru
        _
      %p628 = scmp.le.s32.totalorder 2, %s18
      // Predicated region
      $region68: #{_multi_ip_forward.1} parent=5 // pred_check
        %p629 = pneg %p628
      $region69: #{_multi_ip_forward.1} parent=5 // pred_check_branch
        %631 = sbr.rel (%p629) target = $region71
      $region70: #{_multi_ip_forward.1} parent=5 // pred_region
        %s632 = ssub.s32 %s18, 2
        // Predicated region
        $region72: #{_multi_ip_forward.1} parent=70 // pred_check
          %p633 = pneg %p199
        $region73: #{_multi_ip_forward.1} parent=70 // pred_check_branch
          %635 = sbr.rel (%p633) target = $region75
        $region74: #{_multi_ip_forward.1} parent=70 // pred_region
          %s636 = smul.u32 4, %s29
          %p637 = scmp.lt.s32.totalorder %s30, 0
          %s638 = scalar_select %p637, %s30, 0
          %p639 = scmp.lt.s32.totalorder %s636, 11
          %s640 = scalar_select %p639, %s636, 11
          %s641 = smul.addr %s638, 12
          %s642 = sadd.s32 %s640, %s641
          %s643 = smul.addr %s642, 8
          %s644 = scalar_lea.vmem %s6, %s643
        $region75: #{_multi_ip_forward.1} parent=70 // pred_fallthru
          _
      $region71: #{_multi_ip_forward.1} parent=5 // pred_fallthru
        _
    $region6: #{_multi_ip_forward.1} parent=1 // loop_footer
      %s22 = sadd.s32 1, %s18
    $region7: #{_multi_ip_forward.1} parent=1 // loop_footer_branch
      %17 = sbr.rel target = $region3
    $region8: #{_multi_ip_forward.1} parent=1 // loop_exit
      _

</llo_original>
